<compile_context>
chip_gen: v6e
topology: v6e:2x2x1
jax: 0.10.0
libtpu: 0.0.40
codegen_flags: <defaults>
</compile_context>

<pallas_src>
import functools

import jax
import jax.numpy as jnp
import numpy as np
from jax import lax
from jax.experimental import pallas as pl
from jax.experimental.pallas import tpu as pltpu

_EPS = 1e-5
_LANE = 128
_VMEM_LIMIT = 32 * 1024 * 1024   # explicit scoped-VMEM budget; safe on v5e/v6e/v7x


def _round_up(n, m):
    return ((n + m - 1) // m) * m


def _pick_tile(m):
    """Largest row-tile (multiple of 8, <=256) that divides m."""
    for t in (256, 128, 64, 32, 16, 8):
        if m % t == 0:
            return t
    return m


def _compiler_params():
    return pltpu.CompilerParams(
        dimension_semantics=("parallel",),     # megacore-friendly grid (v7x: 2 TCs)
        vmem_limit_bytes=_VMEM_LIMIT)


# --------------------------------------------------------------------------- kernels

def _mm_stats_kernel(*refs, in_bn):
    """1x1 conv for one row tile: y = [BN+ReLU](x) @ w, plus per-tile sum/sumsq of y."""
    if in_bn:
        x_ref, w_ref, sc_ref, sh_ref, y_ref, s_ref, q_ref = refs
    else:
        x_ref, w_ref, y_ref, s_ref, q_ref = refs
    x = x_ref[...]
    if in_bn:
        # fused BN affine of the *previous* conv (scale/shift precomputed per channel)
        x = jnp.maximum(x * sc_ref[...] + sh_ref[...], 0.0)
    y = jnp.dot(x, w_ref[...], preferred_element_type=jnp.float32)
    y_ref[...] = y
    # one-pass batch-stats contribution of this tile (combined globally in the wrapper)
    s_ref[...] = jnp.sum(y, axis=0, keepdims=True)[None]
    q_ref[...] = jnp.sum(y * y, axis=0, keepdims=True)[None]


def _conv3x3_stats_kernel(x_ref, w_ref, sc_ref, sh_ref, y_ref, s_ref, q_ref,
                          pad_ref, col_ref):
    """BN+ReLU on the input image, then 3x3/pad=1/stride=1 conv as ONE K=9*C matmul."""
    _, h, w, c = x_ref.shape
    cout = w_ref.shape[1]
    a = jnp.maximum(x_ref[0] * sc_ref[0] + sh_ref[0], 0.0)          # (H, W, C)

    # zero-pad by 1 pixel: write the interior once, zero only the halo rows/cols
    pad_ref[1:h + 1, 1:w + 1, :] = a
    zrow = jnp.zeros((1, w + 2, c), jnp.float32)
    pad_ref[0:1, :, :] = zrow
    pad_ref[h + 1:h + 2, :, :] = zrow
    zcol = jnp.zeros((h, 1, c), jnp.float32)
    pad_ref[1:h + 1, 0:1, :] = zcol
    pad_ref[1:h + 1, w + 1:w + 2, :] = zcol

    # im2col: 9 shifted windows gathered into one lane-dense (H*W, 9*C) operand
    for kh in range(3):
        for kw in range(3):
            t = kh * 3 + kw
            col_ref[:, t * c:(t + 1) * c] = (
                pad_ref[kh:kh + h, kw:kw + w, :].reshape(h * w, c))

    y = jnp.dot(col_ref[...], w_ref[...], preferred_element_type=jnp.float32)
    y_ref[...] = y.reshape(1, h, w, cout)
    s_ref[...] = jnp.sum(y, axis=0, keepdims=True)[None]
    q_ref[...] = jnp.sum(y * y, axis=0, keepdims=True)[None]


def _fuse_kernel(*refs, bn_short):
    """out = ReLU(BN3(h) + [BN_s(shortcut) | identity]) for one row tile."""
    if bn_short:
        h_ref, r_ref, hs_ref, hb_ref, ss_ref, sb_ref, y_ref = refs
    else:
        h_ref, r_ref, hs_ref, hb_ref, y_ref = refs
    h = h_ref[...] * hs_ref[...] + hb_ref[...]
    r = r_ref[...]
    if bn_short:
        r = r * ss_ref[...] + sb_ref[...]
    y_ref[...] = jnp.maximum(h + r, 0.0).astype(y_ref.dtype)


# ------------------------------------------------------------------------- wrappers

def _conv1x1_stats(x2d, w, in_affine=None):
    m, k = x2d.shape
    cout = w.shape[1]
    tm = _pick_tile(m)
    nt = m // tm
    in_bn = in_affine is not None

    args = [x2d, w]
    in_specs = [pl.BlockSpec((tm, k), lambda i: (i, 0)),
                # weights stay resident across the whole grid (constant index map)
                pl.BlockSpec((k, cout), lambda i: (0, 0))]
    if in_bn:
        args += [in_affine[0], in_affine[1]]
        in_specs += [pl.BlockSpec((1, k), lambda i: (0, 0)),
                     pl.BlockSpec((1, k), lambda i: (0, 0))]

    y, s, q = pl.pallas_call(
        functools.partial(_mm_stats_kernel, in_bn=in_bn),
        grid=(nt,),
        in_specs=in_specs,
        out_specs=(pl.BlockSpec((tm, cout), lambda i: (i, 0)),
                   pl.BlockSpec((1, 1, cout), lambda i: (i, 0, 0)),
                   pl.BlockSpec((1, 1, cout), lambda i: (i, 0, 0))),
        out_shape=(jax.ShapeDtypeStruct((m, cout), jnp.float32),
                   jax.ShapeDtypeStruct((nt, 1, cout), jnp.float32),
                   jax.ShapeDtypeStruct((nt, 1, cout), jnp.float32)),
        compiler_params=_compiler_params(),
        cost_estimate=pl.CostEstimate(
            flops=2 * m * k * cout, transcendentals=0,
            bytes_accessed=4 * (m * k + k * cout + m * cout)),
    )(*args)
    return y, s, q


def _conv3x3_stats(x4d, w2_flat, in_affine):
    n, h, w, c = x4d.shape
    cout = w2_flat.shape[1]
    sc, sh = in_affine
    y, s, q = pl.pallas_call(
        _conv3x3_stats_kernel,
        grid=(n,),
        in_specs=[pl.BlockSpec((1, h, w, c), lambda i: (i, 0, 0, 0)),
                  pl.BlockSpec((9 * c, cout), lambda i: (0, 0)),
                  pl.BlockSpec((1, c), lambda i: (0, 0)),
                  pl.BlockSpec((1, c), lambda i: (0, 0))],
        out_specs=(pl.BlockSpec((1, h, w, cout), lambda i: (i, 0, 0, 0)),
                   pl.BlockSpec((1, 1, cout), lambda i: (i, 0, 0)),
                   pl.BlockSpec((1, 1, cout), lambda i: (i, 0, 0))),
        out_shape=(jax.ShapeDtypeStruct((n, h, w, cout), jnp.float32),
                   jax.ShapeDtypeStruct((n, 1, cout), jnp.float32),
                   jax.ShapeDtypeStruct((n, 1, cout), jnp.float32)),
        scratch_shapes=[pltpu.VMEM((h + 2, w + 2, c), jnp.float32),
                        pltpu.VMEM((h * w, 9 * c), jnp.float32)],
        compiler_params=_compiler_params(),
        cost_estimate=pl.CostEstimate(
            flops=2 * n * h * w * 9 * c * cout, transcendentals=0,
            bytes_accessed=4 * (n * h * w * c + 9 * c * cout + n * h * w * cout)),
    )(x4d, w2_flat, sc, sh)
    return y, s, q


def _fuse(h2d, r2d, h_affine, r_affine, out_dtype):
    m, c = h2d.shape
    tm = _pick_tile(m)
    nt = m // tm
    bn_short = r_affine is not None
    args = [h2d, r2d, h_affine[0], h_affine[1]]
    in_specs = [pl.BlockSpec((tm, c), lambda i: (i, 0)),
                pl.BlockSpec((tm, c), lambda i: (i, 0)),
                pl.BlockSpec((1, c), lambda i: (0, 0)),
                pl.BlockSpec((1, c), lambda i: (0, 0))]
    if bn_short:
        args += [r_affine[0], r_affine[1]]
        in_specs += [pl.BlockSpec((1, c), lambda i: (0, 0)),
                     pl.BlockSpec((1, c), lambda i: (0, 0))]
    return pl.pallas_call(
        functools.partial(_fuse_kernel, bn_short=bn_short),
        grid=(nt,),
        in_specs=in_specs,
        out_specs=pl.BlockSpec((tm, c), lambda i: (i, 0)),
        out_shape=jax.ShapeDtypeStruct((m, c), out_dtype),
        compiler_params=_compiler_params(),
    )(*args)


def _bn_affine(s_parts, q_parts, gamma, beta, count):
    """Two-pass BN finalize: combine per-tile partials -> per-channel scale/shift.

    O(C) glue between pallas_calls.  Keep f32 and clamp var>=0 since var uses
    E[x^2]-E[x]^2 (one-pass stats inside the kernels)."""
    s = jnp.sum(s_parts, axis=(0, 1))
    q = jnp.sum(q_parts, axis=(0, 1))
    mean = s / count
    var = jnp.maximum(q / count - mean * mean, 0.0)
    scale = gamma.reshape(-1) * lax.rsqrt(var + _EPS)
    shift = beta.reshape(-1) - mean * scale
    return (scale.reshape(1, -1).astype(jnp.float32),
            shift.reshape(1, -1).astype(jnp.float32))


def _pad_last(a, new):
    pad = new - a.shape[-1]
    if pad == 0:
        return a
    return jnp.pad(a, [(0, 0)] * (a.ndim - 1) + [(0, pad)])


def _pad_gamma(g, new):
    g = g.reshape(1, -1)
    if g.shape[-1] == new:
        return g
    return jnp.pad(g, ((0, 0), (0, new - g.shape[-1])), constant_values=1.0)


def _pad_beta(b, new):
    return _pad_last(b.reshape(1, -1), new)


def _pad_w(wt, k_new, n_new):
    return jnp.pad(wt, ((0, k_new - wt.shape[0]), (0, n_new - wt.shape[1])))


def bottleneck_forward(x, params, *, stride=1):
    """One BottleNeck block forward, NHWC activations.

    Matches PyTorch train-mode semantics of a freshly constructed block: bias-free
    convs, BatchNorm with per-batch statistics, eps=1e-5, ReLU at the end.
    """
    if stride != 1:
        # TODO(synk): strided conv2/shortcut path (Lightnet builds every layer with stride=1).
        raise NotImplementedError("Lightnet only uses stride=1 bottleneck layers")

    n, h, w, cin = x.shape
    cm = params["w1"].shape[1]
    ce = params["w3"].shape[1]
    has_shortcut = cin != ce
    m = n * h * w

    # lane-dense layout: pad every channel axis to a multiple of 128 (zero weights /
    # gamma=1 / beta=0 on padded channels keep the math exact; padding sliced off at the end)
    cin_p = _round_up(cin, _LANE)
    cm_p = _round_up(cm, _LANE)
    ce_p = _round_up(ce, _LANE)

    xp = _pad_last(x, cin_p).astype(jnp.float32)
    x2d = xp.reshape(m, cin_p)

    w1 = _pad_w(params["w1"], cin_p, cm_p)
    w2 = jnp.pad(params["w2"],
                 ((0, 0), (0, 0), (0, cm_p - cm), (0, cm_p - cm))).reshape(9 * cm_p, cm_p)
    w3 = _pad_w(params["w3"], cm_p, ce_p)
    g1, b1 = _pad_gamma(params["g1"], cm_p), _pad_beta(params["b1"], cm_p)
    g2, b2 = _pad_gamma(params["g2"], cm_p), _pad_beta(params["b2"], cm_p)
    g3, b3 = _pad_gamma(params["g3"], ce_p), _pad_beta(params["b3"], ce_p)

    # conv1 (1x1)                                    -> pre-BN activations + stats
    h1, s1, q1 = _conv1x1_stats(x2d, w1)
    aff1 = _bn_affine(s1, q1, g1, b1, m)
    # conv2 (3x3, pad=1) with BN1+ReLU fused on its input, one K=9*Cm matmul
    h2, s2, q2 = _conv3x3_stats(h1.reshape(n, h, w, cm_p), w2, aff1)
    aff2 = _bn_affine(s2, q2, g2, b2, m)
    # conv3 (1x1) with BN2+ReLU fused on its input
    h3, s3, q3 = _conv1x1_stats(h2.reshape(m, cm_p), w3, in_affine=aff2)
    aff3 = _bn_affine(s3, q3, g3, b3, m)

    if has_shortcut:
        ws = _pad_w(params["ws"], cin_p, ce_p)
        gs, bs = _pad_gamma(params["gs"], ce_p), _pad_beta(params["bs"], ce_p)
        r, sr, qr = _conv1x1_stats(x2d, ws)
        affs = _bn_affine(sr, qr, gs, bs, m)
        y2d = _fuse(h3, r, aff3, affs, x.dtype)
    else:
        # identity shortcut (Cin == Ce, so padded widths match too)
        y2d = _fuse(h3, x2d, aff3, None, x.dtype)

    return y2d.reshape(n, h, w, ce_p)[..., :ce]


# ------------------------------------------------------------------------ reference

def _ref_forward(x, p, *, stride=1):
    """Pure-JAX reference (lax convs), PyTorch train-mode BN semantics."""
    def conv(hh, wt, s, padding):
        return lax.conv_general_dilated(
            hh, wt, window_strides=(s, s), padding=padding,
            dimension_numbers=("NHWC", "HWIO", "NHWC"),
            precision=lax.Precision.HIGHEST)

    def bn(hh, g, b, relu):
        mu = jnp.mean(hh, axis=(0, 1, 2), keepdims=True)
        var = jnp.mean((hh - mu) ** 2, axis=(0, 1, 2), keepdims=True)
        out = (hh - mu) * lax.rsqrt(var + _EPS) * g.reshape(1, 1, 1, -1) \
              + b.reshape(1, 1, 1, -1)
        return jnp.maximum(out, 0.0) if relu else out

    cin = x.shape[-1]
    cm = p["w1"].shape[1]
    ce = p["w3"].shape[1]
    h = conv(x, p["w1"].reshape(1, 1, cin, cm), 1, "VALID")
    h = bn(h, p["g1"], p["b1"], True)
    h = conv(h, p["w2"], stride, [(1, 1), (1, 1)])
    h = bn(h, p["g2"], p["b2"], True)
    h = conv(h, p["w3"].reshape(1, 1, cm, ce), 1, "VALID")
    h = bn(h, p["g3"], p["b3"], False)
    if stride != 1 or cin != ce:
        s = conv(x, p["ws"].reshape(1, 1, cin, ce), stride, "VALID")
        s = bn(s, p["gs"], p["bs"], False)
    else:
        s = x
    return jnp.maximum(h + s, 0.0)


def _make_params(key, cin, cm, ce, with_shortcut):
    ks = jax.random.split(key, 12)
    p = {
        "w1": jax.random.normal(ks[0], (cin, cm), jnp.float32) * 0.2,
        "g1": 1.0 + 0.1 * jax.random.normal(ks[1], (1, cm), jnp.float32),
        "b1": 0.1 * jax.random.normal(ks[2], (1, cm), jnp.float32),
        "w2": jax.random.normal(ks[3], (3, 3, cm, cm), jnp.float32) * 0.1,
        "g2": 1.0 + 0.1 * jax.random.normal(ks[4], (1, cm), jnp.float32),
        "b2": 0.1 * jax.random.normal(ks[5], (1, cm), jnp.float32),
        "w3": jax.random.normal(ks[6], (cm, ce), jnp.float32) * 0.2,
        "g3": 1.0 + 0.1 * jax.random.normal(ks[7], (1, ce), jnp.float32),
        "b3": 0.1 * jax.random.normal(ks[8], (1, ce), jnp.float32),
    }
    if with_shortcut:
        p["ws"] = jax.random.normal(ks[9], (cin, ce), jnp.float32) * 0.2
        p["gs"] = 1.0 + 0.1 * jax.random.normal(ks[10], (1, ce), jnp.float32)
        p["bs"] = 0.1 * jax.random.normal(ks[11], (1, ce), jnp.float32)
    return p


if __name__ == "__main__":
    # Lightnet's first residual stage (conv1_0, stride=1):
    #   block 0: in=32,  mid=64, out=256 -> projection shortcut (1x1 conv + BN)
    #   block 1: in=256, mid=64, out=256 -> identity shortcut
    N, H, W = 2, 16, 16
    C0, CM = 32, 64
    CE = CM * 4                         # BottleNeck.expansion = 4

    key = jax.random.PRNGKey(0)
    kx, k1, k2 = jax.random.split(key, 3)
    x = jax.random.normal(kx, (N, H, W, C0), jnp.float32)
    p1 = _make_params(k1, C0, CM, CE, with_shortcut=True)
    p2 = _make_params(k2, CE, CM, CE, with_shortcut=False)

    y1 = bottleneck_forward(x, p1)
    y2 = bottleneck_forward(y1, p2)
    y2 = jax.block_until_ready(y2)

    r1 = _ref_forward(x, p1)
    r2 = _ref_forward(y1, p2)           # isolate block-2 comparison from block-1 noise
    np.testing.assert_allclose(np.asarray(y1), np.asarray(r1), rtol=2e-3, atol=2e-3)
    np.testing.assert_allclose(np.asarray(y2), np.asarray(r2), rtol=2e-3, atol=2e-3)
    print("KERNEL_OK")
</pallas_src>

<mosaic_0001>
module attributes {stable_mosaic.version = 11 : i64} {
  func.func @_mm_stats_kernel(%arg0: i32, %arg1: memref<256x128xf32, #tpu.memory_space<vmem>>, %arg2: memref<128x128xf32, #tpu.memory_space<vmem>>, %arg3: memref<256x128xf32, #tpu.memory_space<vmem>>, %arg4: memref<1x1x128xf32, #tpu.memory_space<vmem>>, %arg5: memref<1x1x128xf32, #tpu.memory_space<vmem>>) attributes {dimension_semantics = [#tpu.dimension_semantics<parallel>], iteration_bounds = array<i64: 2>, scalar_prefetch = 0 : i64, scratch_operands = 0 : i64, tpu.core_type = #tpu.core_type<tc>, window_params = [{transform_indices = @transform_0, window_bounds = array<i64: 256, 128>}, {pipeline_mode = #tpu.pipeline_mode<synchronous>, transform_indices = @transform_1, window_bounds = array<i64: 128, 128>}, {transform_indices = @transform_2, window_bounds = array<i64: 256, 128>}, {transform_indices = @transform_3, window_bounds = array<i64: 1, 1, 128>}, {transform_indices = @transform_4, window_bounds = array<i64: 1, 1, 128>}]} {
    %c0 = arith.constant 0 : index
    %c0_0 = arith.constant 0 : index
    %0 = vector.load %arg1[%c0, %c0_0] : memref<256x128xf32, #tpu.memory_space<vmem>>, vector<256x128xf32>
    %c0_1 = arith.constant 0 : index
    %c0_2 = arith.constant 0 : index
    %1 = vector.load %arg2[%c0_1, %c0_2] : memref<128x128xf32, #tpu.memory_space<vmem>>, vector<128x128xf32>
    %cst = arith.constant dense<0.000000e+00> : vector<256x128xf32>
    %2 = tpu.matmul %0, %1, %cst {dimension_numbers = #tpu.dot_dimension_numbers<[1], [0], [0], [1], [0, 0, 1, 1], [], []>} : vector<256x128xf32>, vector<128x128xf32>, vector<256x128xf32> -> vector<256x128xf32>
    %c0_3 = arith.constant 0 : index
    %c0_4 = arith.constant 0 : index
    %3 = vector.load %arg3[%c0_3, %c0_4] : memref<256x128xf32, #tpu.memory_space<vmem>>, vector<256x128xf32>
    tpu.vector_store %arg3[%c0_3, %c0_4], %2 {strides = array<i32>} : memref<256x128xf32, #tpu.memory_space<vmem>>, vector<256x128xf32>,
    %cst_5 = arith.constant dense<0.000000e+00> : vector<128xf32>
    %4 = vector.multi_reduction <add>, %2, %cst_5 [0] : vector<256x128xf32> to vector<128xf32>
    %5 = vector.shape_cast %4 : vector<128xf32> to vector<1x128xf32>
    %6 = vector.shape_cast %5 : vector<1x128xf32> to vector<1x1x128xf32>
    %c0_6 = arith.constant 0 : index
    %c0_7 = arith.constant 0 : index
    %c0_8 = arith.constant 0 : index
    %7 = vector.load %arg4[%c0_6, %c0_7, %c0_8] : memref<1x1x128xf32, #tpu.memory_space<vmem>>, vector<1x1x128xf32>
    tpu.vector_store %arg4[%c0_6, %c0_7, %c0_8], %6 {strides = array<i32>} : memref<1x1x128xf32, #tpu.memory_space<vmem>>, vector<1x1x128xf32>,
    %8 = arith.mulf %2, %2 : vector<256x128xf32>
    %cst_9 = arith.constant dense<0.000000e+00> : vector<128xf32>
    %9 = vector.multi_reduction <add>, %8, %cst_9 [0] : vector<256x128xf32> to vector<128xf32>
    %10 = vector.shape_cast %9 : vector<128xf32> to vector<1x128xf32>
    %11 = vector.shape_cast %10 : vector<1x128xf32> to vector<1x1x128xf32>
    %c0_10 = arith.constant 0 : index
    %c0_11 = arith.constant 0 : index
    %c0_12 = arith.constant 0 : index
    %12 = vector.load %arg5[%c0_10, %c0_11, %c0_12] : memref<1x1x128xf32, #tpu.memory_space<vmem>>, vector<1x1x128xf32>
    tpu.vector_store %arg5[%c0_10, %c0_11, %c0_12], %11 {strides = array<i32>} : memref<1x1x128xf32, #tpu.memory_space<vmem>>, vector<1x1x128xf32>,
    return
  }
  func.func @transform_0(%arg0: i32) -> (i32, i32) {
    %c0_i32 = arith.constant 0 : i32
    %c0_i32_0 = arith.constant 0 : i32
    return %arg0, %c0_i32 : i32, i32
  }
  func.func @transform_1(%arg0: i32) -> (i32, i32) {
    %c0_i32 = arith.constant 0 : i32
    %c0_i32_0 = arith.constant 0 : i32
    %c0_i32_1 = arith.constant 0 : i32
    return %c0_i32, %c0_i32_0 : i32, i32
  }
  func.func @transform_2(%arg0: i32) -> (i32, i32) {
    %c0_i32 = arith.constant 0 : i32
    %c0_i32_0 = arith.constant 0 : i32
    return %arg0, %c0_i32 : i32, i32
  }
  func.func @transform_3(%arg0: i32) -> (i32, i32, i32) {
    %c0_i32 = arith.constant 0 : i32
    %c0_i32_0 = arith.constant 0 : i32
    %c0_i32_1 = arith.constant 0 : i32
    return %arg0, %c0_i32, %c0_i32_0 : i32, i32, i32
  }
  func.func @transform_4(%arg0: i32) -> (i32, i32, i32) {
    %c0_i32 = arith.constant 0 : i32
    %c0_i32_0 = arith.constant 0 : i32
    %c0_i32_1 = arith.constant 0 : i32
    return %arg0, %c0_i32, %c0_i32_0 : i32, i32, i32
  }
}

</mosaic_0001>

<llo_original>
// kernel: tpu_custom_call.1
$region0: #{tpu_custom_call.1}
  #allocation0 [shape = 'u32[]', space=smem, size = 0x4, offset = 0x4, fixed_abs, tag = 'smem constant byte address 0x4 - core index']
  #allocation1 [shape = 'u32[144,128]{1,0:T(1,128)}', space=vmem, size = 0x12000, scoped, tag = 'internal scratch']
  %s0 = inlined_call_operand.hbm [shape: f32[512,128], index: 0, kind: input, shape index: {}]
  %s1 = inlined_call_operand.hbm [shape: f32[128,128], index: 1, kind: input, shape index: {}]
  %s2 = inlined_call_operand.hbm [shape: f32[512,128], index: 2, kind: output, shape index: {0}]
  %s3 = inlined_call_operand.hbm [shape: f32[2,1,128], index: 3, kind: output, shape index: {1}]
  %s4 = inlined_call_operand.hbm [shape: f32[2,1,128], index: 4, kind: output, shape index: {2}]
  %5 = xla_tuple %s2, %s3, %s4
  %s6 = sld [smem:[#allocation0]]
  $region65: #{tpu_custom_call.1} parent=0
    _
  %s8 = ssub.s32 1, %s6
  %s9 = scalar_select 0, %s8, %s6
  $region1: #{tpu_custom_call.1} parent=0
    #allocation2 [shape = 'u8[262144]{0}', space=vmem, size = 0x40000, scoped, tag = 'input window, operand 0']
    #allocation3 [shape = 's32[2]{0}', space=sflag, size = 0x8, scoped, tag = 'scoped memory for tpu_custom_call.1']
    #allocation4 [shape = 's32[2]{0}', space=sflag, size = 0x8, scoped, tag = 'scoped memory for tpu_custom_call.1']
    #allocation5 [shape = 'u8[65536]{0}', space=vmem, size = 0x10000, scoped, tag = 'input window, operand 1, single buffered']
    #allocation6 [shape = 's32[1]{0}', space=sflag, size = 0x4, scoped, tag = 'scoped memory for tpu_custom_call.1']
    #allocation7 [shape = 'u8[262144]{0}', space=vmem, size = 0x40000, scoped, tag = 'output window, operand 0']
    #allocation8 [shape = 'u8[1024]{0}', space=vmem, size = 0x400, scoped, tag = 'output window, operand 1']
    #allocation9 [shape = 's32[2]{0}', space=sflag, size = 0x8, scoped, tag = 'scoped memory for tpu_custom_call.1']
    #allocation10 [shape = 'u8[1024]{0}', space=vmem, size = 0x400, scoped, tag = 'output window, operand 2']
    %10 = vsyncpa [#allocation3], 0
    %s11 = scalar_lea.sflag [#allocation3], 1
    %12 = vsyncpa %s11, 0
    %13 = vsyncpa [#allocation6], 0
    %14 = vsyncpa [#allocation4], 0
    %s15 = scalar_lea.sflag [#allocation4], 1
    %16 = vsyncpa %s15, 0
    %17 = vsyncpa [#allocation9], 0
    %s18 = scalar_lea.sflag [#allocation9], 1
    %19 = vsyncpa %s18, 0
    loop: start=0, step=1, limit=4
    $region2: #{tpu_custom_call.1} parent=1 // loop_pre_header
      _
    $region3: #{tpu_custom_call.1} parent=1 // loop_header
      %s21 = sphi 0, %s25
      %p22 = scmp.ge.s32.totalorder %s21, 4
      %s31 = sphi 0, %s33
      %s34 = sphi 0, %s31
      %s35 = sphi 0, %s34
      %s51 = sphi 0, %s35
      %s55 = sphi 0, %s55
      %s57 = sphi 0, %s55
      %s58 = sphi 0, %s57
      %s72 = sphi 0, %s58
      %s78 = sphi 0, %s80
      %s81 = sphi 0, %s78
      %s82 = sphi 0, %s81
      %s98 = sphi 0, %s82
      %s104 = sphi 0, %s106
      %s107 = sphi 0, %s104
      %s108 = sphi 0, %s107
      %s124 = sphi 0, %s108
      %s130 = sphi 0, %s132
      %s133 = sphi 0, %s130
      %s134 = sphi 0, %s133
      %s150 = sphi 0, %s134
    $region4: #{tpu_custom_call.1} parent=1 // loop_header_branch
      %24 = sbr.rel (%p22) target = $region8
    $region5: #{tpu_custom_call.1} parent=1 // loop_body
      %s26 = ssub.s32 %s21, 1
      %s27 = ssub.s32 %s21, 2
      %s28 = sadd.s32 %s21, 1
      %s29 = ssub.s32 %s21, %s28
      %p30 = scmp.eq.s32.totalorder %s29, 0
      %s32 = sadd.s32 %s31, 1
      %s33 = scalar_select %p30, %s31, %s32
      %p36 = pneg %p30
      %p37 = scmp.eq.s32.totalorder %s21, 1
      %p38 = por %p36, %p37
      %p39 = scmp.ne.s32.totalorder %s31, %s34
      %p40 = scmp.eq.s32.totalorder %s21, 0
      %p41 = por %p39, %p40
      %p42 = scmp.ne.s32.totalorder %s31, %s34
      %p43 = scmp.eq.s32.totalorder %s26, 1
      %p44 = por %p42, %p43
      %p45 = scmp.ne.s32.totalorder %s34, %s35
      %p46 = scmp.eq.s32.totalorder %s26, 0
      %p47 = por %p45, %p46
      %p48 = scmp.ne.s32.totalorder %s34, %s35
      %p49 = scmp.eq.s32.totalorder %s27, 1
      %p50 = por %p48, %p49
      %p52 = scmp.ne.s32.totalorder %s35, %s51
      %p53 = scmp.eq.s32.totalorder %s27, 0
      %p54 = por %p52, %p53
      %s56 = sadd.s32 %s55, 1
      %p59 = scmp.eq.s32.totalorder %s21, 1
      %p60 = scmp.ne.s32.totalorder %s55, %s57
      %p61 = scmp.eq.s32.totalorder %s21, 0
      %p62 = por %p60, %p61
      %p63 = scmp.ne.s32.totalorder %s55, %s57
      %p64 = scmp.eq.s32.totalorder %s26, 1
      %p65 = por %p63, %p64
      %p66 = scmp.ne.s32.totalorder %s57, %s58
      %p67 = scmp.eq.s32.totalorder %s26, 0
      %p68 = por %p66, %p67
      %p69 = scmp.ne.s32.totalorder %s57, %s58
      %p70 = scmp.eq.s32.totalorder %s27, 1
      %p71 = por %p69, %p70
      %p73 = scmp.ne.s32.totalorder %s58, %s72
      %p74 = scmp.eq.s32.totalorder %s27, 0
      %p75 = por %p73, %p74
      %s76 = ssub.s32 %s21, %s28
      %p77 = scmp.eq.s32.totalorder %s76, 0
      %s79 = sadd.s32 %s78, 1
      %s80 = scalar_select %p77, %s78, %s79
      %p83 = pneg %p77
      %p84 = scmp.eq.s32.totalorder %s21, 1
      %p85 = por %p83, %p84
      %p86 = scmp.ne.s32.totalorder %s78, %s81
      %p87 = scmp.eq.s32.totalorder %s21, 0
      %p88 = por %p86, %p87
      %p89 = scmp.ne.s32.totalorder %s78, %s81
      %p90 = scmp.eq.s32.totalorder %s26, 1
      %p91 = por %p89, %p90
      %p92 = scmp.ne.s32.totalorder %s81, %s82
      %p93 = scmp.eq.s32.totalorder %s26, 0
      %p94 = por %p92, %p93
      %p95 = scmp.ne.s32.totalorder %s81, %s82
      %p96 = scmp.eq.s32.totalorder %s27, 1
      %p97 = por %p95, %p96
      %p99 = scmp.ne.s32.totalorder %s82, %s98
      %p100 = scmp.eq.s32.totalorder %s27, 0
      %p101 = por %p99, %p100
      %s102 = ssub.s32 %s21, %s28
      %p103 = scmp.eq.s32.totalorder %s102, 0
      %s105 = sadd.s32 %s104, 1
      %s106 = scalar_select %p103, %s104, %s105
      %p109 = pneg %p103
      %p110 = scmp.eq.s32.totalorder %s21, 1
      %p111 = por %p109, %p110
      %p112 = scmp.ne.s32.totalorder %s104, %s107
      %p113 = scmp.eq.s32.totalorder %s21, 0
      %p114 = por %p112, %p113
      %p115 = scmp.ne.s32.totalorder %s104, %s107
      %p116 = scmp.eq.s32.totalorder %s26, 1
      %p117 = por %p115, %p116
      %p118 = scmp.ne.s32.totalorder %s107, %s108
      %p119 = scmp.eq.s32.totalorder %s26, 0
      %p120 = por %p118, %p119
      %p121 = scmp.ne.s32.totalorder %s107, %s108
      %p122 = scmp.eq.s32.totalorder %s27, 1
      %p123 = por %p121, %p122
      %p125 = scmp.ne.s32.totalorder %s108, %s124
      %p126 = scmp.eq.s32.totalorder %s27, 0
      %p127 = por %p125, %p126
      %s128 = ssub.s32 %s21, %s28
      %p129 = scmp.eq.s32.totalorder %s128, 0
      %s131 = sadd.s32 %s130, 1
      %s132 = scalar_select %p129, %s130, %s131
      %p135 = pneg %p129
      %p136 = scmp.eq.s32.totalorder %s21, 1
      %p137 = por %p135, %p136
      %p138 = scmp.ne.s32.totalorder %s130, %s133
      %p139 = scmp.eq.s32.totalorder %s21, 0
      %p140 = por %p138, %p139
      %p141 = scmp.ne.s32.totalorder %s130, %s133
      %p142 = scmp.eq.s32.totalorder %s26, 1
      %p143 = por %p141, %p142
      %p144 = scmp.ne.s32.totalorder %s133, %s134
      %p145 = scmp.eq.s32.totalorder %s26, 0
      %p146 = por %p144, %p145
      %p147 = scmp.ne.s32.totalorder %s133, %s134
      %p148 = scmp.eq.s32.totalorder %s27, 1
      %p149 = por %p147, %p148
      %p151 = scmp.ne.s32.totalorder %s134, %s150
      %p152 = scmp.eq.s32.totalorder %s27, 0
      %p153 = por %p151, %p152
      %p154 = scmp.le.s32.totalorder 1, %s21
      %p155 = scmp.lt.s32.totalorder %s21, 3
      %p156 = pnand %p154, %p155
      %p157 = pneg %p156
      // Predicated region
      $region9: #{tpu_custom_call.1} parent=5 // pred_check
        _
      $region10: #{tpu_custom_call.1} parent=5 // pred_check_branch
        %159 = sbr.rel (%p156) target = $region12
      $region11: #{tpu_custom_call.1} parent=5 // pred_region
        %s160 = ssub.s32 %s21, 1
        // Predicated region
        $region13: #{tpu_custom_call.1} parent=11 // pred_check
          %p161 = pneg %p68
        $region14: #{tpu_custom_call.1} parent=11 // pred_check_branch
          %163 = sbr.rel (%p161) target = $region16
        $region15: #{tpu_custom_call.1} parent=11 // pred_region
          %s165 = ssub.s32 2048, 2048
          %166 = vsyncadd [#allocation6], %s165
          %s167 = sshll.u32 [#allocation5], 4
          %s168 = int_to_ptr.vmem [resolvable:$true] %s167
          %173 = dma.hbm_to_vmem [thread:$0]  %s1, 2048, %s168, [#allocation6], 128, 128, 8
        $region16: #{tpu_custom_call.1} parent=11 // pred_fallthru
          _
      $region12: #{tpu_custom_call.1} parent=5 // pred_fallthru
        _
      %p174 = scmp.lt.s32.totalorder %s21, 2
      // Predicated region
      $region17: #{tpu_custom_call.1} parent=5 // pred_check
        %p175 = pneg %p174
      $region18: #{tpu_custom_call.1} parent=5 // pred_check_branch
        %177 = sbr.rel (%p175) target = $region20
      $region19: #{tpu_custom_call.1} parent=5 // pred_region
        // Predicated region
        $region21: #{tpu_custom_call.1} parent=19 // pred_check
          %p178 = pneg %p41
        $region22: #{tpu_custom_call.1} parent=19 // pred_check_branch
          %180 = sbr.rel (%p178) target = $region24
        $region23: #{tpu_custom_call.1} parent=19 // pred_region
          %s181 = sand.u32 %s31, 1
          %s182 = scalar_lea.sflag [#allocation3], %s181
          %s183 = sand.u32 %s31, 1
          %s184 = smul.addr %s183, 256
          %s185 = scalar_lea.vmem [#allocation2], %s184
          %s186 = smul.u32 32, %s21
          %s188 = ssub.s32 4096, 4096
          %189 = vsyncadd %s182, %s188
          %s190 = smul.addr %s186, 128
          %s191 = scalar_lea.hbm %s0, %s190
          %s192 = sshll.u32 %s185, 4
          %s193 = int_to_ptr.vmem [resolvable:$true] %s192
          %198 = dma.hbm_to_vmem [thread:$0]  %s191, 4096, %s193, %s182, 128, 128, 8
        $region24: #{tpu_custom_call.1} parent=19 // pred_fallthru
          _
      $region20: #{tpu_custom_call.1} parent=5 // pred_fallthru
        _
      %p199 = scmp.le.s32.totalorder 1, %s21
      %p200 = scmp.lt.s32.totalorder %s21, 3
      %p201 = pnand %p199, %p200
      %p202 = pneg %p201
      // Predicated region
      $region25: #{tpu_custom_call.1} parent=5 // pred_check
        _
      $region26: #{tpu_custom_call.1} parent=5 // pred_check_branch
        %204 = sbr.rel (%p201) target = $region28
      $region27: #{tpu_custom_call.1} parent=5 // pred_region
        %s205 = ssub.s32 %s21, 1
        %s206 = sand.u32 %s34, 1
        %s207 = scalar_lea.sflag [#allocation3], %s206
        %s208 = sand.u32 %s34, 1
        %s209 = smul.addr %s208, 256
        %s210 = scalar_lea.vmem [#allocation2], %s209
        // Predicated region
        $region29: #{tpu_custom_call.1} parent=27 // pred_check
          %p211 = pneg %p47
        $region30: #{tpu_custom_call.1} parent=27 // pred_check_branch
          %213 = sbr.rel (%p211) target = $region32
        $region31: #{tpu_custom_call.1} parent=27 // pred_region
          %214 = dma.done %s207, 4096
        $region32: #{tpu_custom_call.1} parent=27 // pred_fallthru
          _
        // Predicated region
        $region33: #{tpu_custom_call.1} parent=27 // pred_check
          %p215 = pneg %p68
        $region34: #{tpu_custom_call.1} parent=27 // pred_check_branch
          %217 = sbr.rel (%p215) target = $region36
        $region35: #{tpu_custom_call.1} parent=27 // pred_region
          %218 = dma.done [#allocation6], 2048
        $region36: #{tpu_custom_call.1} parent=27 // pred_fallthru
          _
        %s219 = sand.u32 %s34, 1
        %s220 = scalar_lea.sflag [#allocation3], %s219
        %s221 = sand.u32 %s34, 1
        %s222 = smul.addr %s221, 256
        %s223 = scalar_lea.vmem [#allocation2], %s222
        %p224 = pneg %p47
        %p225 = pneg %p44
        %p226 = pneg %p68
        %p227 = pneg %p65
        %p228 = pneg %p94
        %p229 = pneg %p91
        %s230 = sand.u32 %s81, 1
        %s231 = scalar_lea.sflag [#allocation4], %s230
        %s232 = sand.u32 %s81, 1
        %s233 = smul.addr %s232, 256
        %s234 = scalar_lea.vmem [#allocation7], %s233
        %p235 = pneg %p120
        %p236 = pneg %p117
        %s237 = sand.u32 %s26, 1
        %s238 = scalar_lea.sflag [#allocation9], %s237
        %s239 = sand.u32 %s107, 1
        %s240 = scalar_lea.vmem [#allocation8], %s239
        %p241 = pneg %p146
        %p242 = pneg %p143
        %s243 = sand.u32 %s26, 1
        %s244 = scalar_lea.sflag [#allocation9], %s243
        %s245 = sand.u32 %s133, 1
        %s246 = scalar_lea.vmem [#allocation10], %s245
        %s247 = smul.u32 32, %s26
        %s248 = smul.u32 32, %s26
        %v249 = vld [vmem:[%s210] sm:$0xff]
        %v250 = vld [vmem:[%s210 + $0x8] sm:$0xff]
        %v251 = vld [vmem:[%s210 + $0x10] sm:$0xff]
        %v252 = vld [vmem:[%s210 + $0x18] sm:$0xff]
        %v253 = vld [vmem:[%s210 + $0x20] sm:$0xff]
        %v254 = vld [vmem:[%s210 + $0x28] sm:$0xff]
        %v255 = vld [vmem:[%s210 + $0x30] sm:$0xff]
        %v256 = vld [vmem:[%s210 + $0x38] sm:$0xff]
        %v257 = vld [vmem:[%s210 + $0x40] sm:$0xff]
        %v258 = vld [vmem:[%s210 + $0x48] sm:$0xff]
        %v259 = vld [vmem:[%s210 + $0x50] sm:$0xff]
        %v260 = vld [vmem:[%s210 + $0x58] sm:$0xff]
        %v261 = vld [vmem:[%s210 + $0x60] sm:$0xff]
        %v262 = vld [vmem:[%s210 + $0x68] sm:$0xff]
        %v263 = vld [vmem:[%s210 + $0x70] sm:$0xff]
        %v264 = vld [vmem:[%s210 + $0x78] sm:$0xff]
        %v265 = vld [vmem:[%s210 + $0x80] sm:$0xff]
        %v266 = vld [vmem:[%s210 + $0x88] sm:$0xff]
        %v267 = vld [vmem:[%s210 + $0x90] sm:$0xff]
        %v268 = vld [vmem:[%s210 + $0x98] sm:$0xff]
        %v269 = vld [vmem:[%s210 + $0xa0] sm:$0xff]
        %v270 = vld [vmem:[%s210 + $0xa8] sm:$0xff]
        %v271 = vld [vmem:[%s210 + $0xb0] sm:$0xff]
        %v272 = vld [vmem:[%s210 + $0xb8] sm:$0xff]
        %v273 = vld [vmem:[%s210 + $0xc0] sm:$0xff]
        %v274 = vld [vmem:[%s210 + $0xc8] sm:$0xff]
        %v275 = vld [vmem:[%s210 + $0xd0] sm:$0xff]
        %v276 = vld [vmem:[%s210 + $0xd8] sm:$0xff]
        %v277 = vld [vmem:[%s210 + $0xe0] sm:$0xff]
        %v278 = vld [vmem:[%s210 + $0xe8] sm:$0xff]
        %v279 = vld [vmem:[%s210 + $0xf0] sm:$0xff]
        %v280 = vld [vmem:[%s210 + $0xf8] sm:$0xff]
        %v281 = vld [vmem:[#allocation5] sm:$0xff]
        %v282 = vld [vmem:[#allocation5 + $0x8] sm:$0xff]
        %v283 = vld [vmem:[#allocation5 + $0x10] sm:$0xff]
        %v284 = vld [vmem:[#allocation5 + $0x18] sm:$0xff]
        %v285 = vld [vmem:[#allocation5 + $0x20] sm:$0xff]
        %v286 = vld [vmem:[#allocation5 + $0x28] sm:$0xff]
        %v287 = vld [vmem:[#allocation5 + $0x30] sm:$0xff]
        %v288 = vld [vmem:[#allocation5 + $0x38] sm:$0xff]
        %v289 = vld [vmem:[#allocation5 + $0x40] sm:$0xff]
        %v290 = vld [vmem:[#allocation5 + $0x48] sm:$0xff]
        %v291 = vld [vmem:[#allocation5 + $0x50] sm:$0xff]
        %v292 = vld [vmem:[#allocation5 + $0x58] sm:$0xff]
        %v293 = vld [vmem:[#allocation5 + $0x60] sm:$0xff]
        %v294 = vld [vmem:[#allocation5 + $0x68] sm:$0xff]
        %v295 = vld [vmem:[#allocation5 + $0x70] sm:$0xff]
        %v296 = vld [vmem:[#allocation5 + $0x78] sm:$0xff]
        %297 = vmatprep.subr.mxu0 0.0
        %298 = vmatpush1.msra.mxu0 %v296
        %299 = vmatprep.subr.mxu0 0.0
        %300 = vmatpush1.msra.mxu0 %v295
        %301 = vmatprep.subr.mxu0 0.0
        %302 = vmatpush1.msra.mxu0 %v294
        %303 = vmatprep.subr.mxu0 0.0
        %304 = vmatpush1.msra.mxu0 %v293
        %305 = vmatprep.subr.mxu0 0.0
        %306 = vmatpush1.msra.mxu0 %v292
        %307 = vmatprep.subr.mxu0 0.0
        %308 = vmatpush1.msra.mxu0 %v291
        %309 = vmatprep.subr.mxu0 0.0
        %310 = vmatpush1.msra.mxu0 %v290
        %311 = vmatprep.subr.mxu0 0.0
        %312 = vmatpush1.msra.mxu0 %v289
        %313 = vmatprep.subr.mxu0 0.0
        %314 = vmatpush1.msra.mxu0 %v288
        %315 = vmatprep.subr.mxu0 0.0
        %316 = vmatpush1.msra.mxu0 %v287
        %317 = vmatprep.subr.mxu0 0.0
        %318 = vmatpush1.msra.mxu0 %v286
        %319 = vmatprep.subr.mxu0 0.0
        %320 = vmatpush1.msra.mxu0 %v285
        %321 = vmatprep.subr.mxu0 0.0
        %322 = vmatpush1.msra.mxu0 %v284
        %323 = vmatprep.subr.mxu0 0.0
        %324 = vmatpush1.msra.mxu0 %v283
        %325 = vmatprep.subr.mxu0 0.0
        %326 = vmatpush1.msra.mxu0 %v282
        %327 = vmatprep.subr.mxu0 0.0
        %328 = vmatpush1.msra.mxu0 %v281
        %329 = vmatprep.subr.mxu0 0.0
        %330 = vmatpush2.msra.mxu0 0.0
        %331 = vmatprep.subr.mxu0 0.0
        %332 = vmatpush2.msra.mxu0 0.0
        %333 = vmatprep.subr.mxu0 0.0
        %334 = vmatpush2.msra.mxu0 0.0
        %335 = vmatprep.subr.mxu0 0.0
        %336 = vmatpush2.msra.mxu0 0.0
        %337 = vmatprep.subr.mxu0 0.0
        %338 = vmatpush2.msra.mxu0 0.0
        %339 = vmatprep.subr.mxu0 0.0
        %340 = vmatpush2.msra.mxu0 0.0
        %341 = vmatprep.subr.mxu0 0.0
        %342 = vmatpush2.msra.mxu0 0.0
        %343 = vmatprep.subr.mxu0 0.0
        %344 = vmatpush2.msra.mxu0 0.0
        %345 = vmatprep.subr.mxu0 0.0
        %346 = vmatpush2.msra.mxu0 0.0
        %347 = vmatprep.subr.mxu0 0.0
        %348 = vmatpush2.msra.mxu0 0.0
        %349 = vmatprep.subr.mxu0 0.0
        %350 = vmatpush2.msra.mxu0 0.0
        %351 = vmatprep.subr.mxu0 0.0
        %352 = vmatpush2.msra.mxu0 0.0
        %353 = vmatprep.subr.mxu0 0.0
        %354 = vmatpush2.msra.mxu0 0.0
        %355 = vmatprep.subr.mxu0 0.0
        %356 = vmatpush2.msra.mxu0 0.0
        %357 = vmatprep.subr.mxu0 0.0
        %358 = vmatpush2.msra.mxu0 0.0
        %359 = vmatprep.subr.mxu0 0.0
        %360 = vmatpush2.msra.mxu0 0.0
        %361 = vmatprep.mubr.f32.mxu0 0.0
        %362 = vmatmul.mubr.f32.gmra.mxu0 %v249
        %v363 = vpop.f32.mrf.mxu0
        %v364 = vadd.f32 0.0, %v363
        %v365 = vpop.f32.mrf.mxu0
        %366 = vmatprep.mubr.f32.mxu0 0.0
        %367 = vmatmul.mubr.f32.gmra.mxu0 %v250
        %v368 = vpop.f32.mrf.mxu0
        %v369 = vadd.f32 0.0, %v368
        %v370 = vpop.f32.mrf.mxu0
        %371 = vmatprep.mubr.f32.mxu0 0.0
        %372 = vmatmul.mubr.f32.gmra.mxu0 %v251
        %v373 = vpop.f32.mrf.mxu0
        %v374 = vadd.f32 0.0, %v373
        %v375 = vpop.f32.mrf.mxu0
        %376 = vmatprep.mubr.f32.mxu0 0.0
        %377 = vmatmul.mubr.f32.gmra.mxu0 %v252
        %v378 = vpop.f32.mrf.mxu0
        %v379 = vadd.f32 0.0, %v378
        %v380 = vpop.f32.mrf.mxu0
        %381 = vmatprep.mubr.f32.mxu0 0.0
        %382 = vmatmul.mubr.f32.gmra.mxu0 %v253
        %v383 = vpop.f32.mrf.mxu0
        %v384 = vadd.f32 0.0, %v383
        %v385 = vpop.f32.mrf.mxu0
        %386 = vmatprep.mubr.f32.mxu0 0.0
        %387 = vmatmul.mubr.f32.gmra.mxu0 %v254
        %v388 = vpop.f32.mrf.mxu0
        %v389 = vadd.f32 0.0, %v388
        %v390 = vpop.f32.mrf.mxu0
        %391 = vmatprep.mubr.f32.mxu0 0.0
        %392 = vmatmul.mubr.f32.gmra.mxu0 %v255
        %v393 = vpop.f32.mrf.mxu0
        %v394 = vadd.f32 0.0, %v393
        %v395 = vpop.f32.mrf.mxu0
        %396 = vmatprep.mubr.f32.mxu0 0.0
        %397 = vmatmul.mubr.f32.gmra.mxu0 %v256
        %v398 = vpop.f32.mrf.mxu0
        %v399 = vadd.f32 0.0, %v398
        %v400 = vpop.f32.mrf.mxu0
        %401 = vmatprep.mubr.f32.mxu0 0.0
        %402 = vmatmul.mubr.f32.gmra.mxu0 %v257
        %v403 = vpop.f32.mrf.mxu0
        %v404 = vadd.f32 0.0, %v403
        %v405 = vpop.f32.mrf.mxu0
        %406 = vmatprep.mubr.f32.mxu0 0.0
        %407 = vmatmul.mubr.f32.gmra.mxu0 %v258
        %v408 = vpop.f32.mrf.mxu0
        %v409 = vadd.f32 0.0, %v408
        %v410 = vpop.f32.mrf.mxu0
        %411 = vmatprep.mubr.f32.mxu0 0.0
        %412 = vmatmul.mubr.f32.gmra.mxu0 %v259
        %v413 = vpop.f32.mrf.mxu0
        %v414 = vadd.f32 0.0, %v413
        %v415 = vpop.f32.mrf.mxu0
        %416 = vmatprep.mubr.f32.mxu0 0.0
        %417 = vmatmul.mubr.f32.gmra.mxu0 %v260
        %v418 = vpop.f32.mrf.mxu0
        %v419 = vadd.f32 0.0, %v418
        %v420 = vpop.f32.mrf.mxu0
        %421 = vmatprep.mubr.f32.mxu0 0.0
        %422 = vmatmul.mubr.f32.gmra.mxu0 %v261
        %v423 = vpop.f32.mrf.mxu0
        %v424 = vadd.f32 0.0, %v423
        %v425 = vpop.f32.mrf.mxu0
        %426 = vmatprep.mubr.f32.mxu0 0.0
        %427 = vmatmul.mubr.f32.gmra.mxu0 %v262
        %v428 = vpop.f32.mrf.mxu0
        %v429 = vadd.f32 0.0, %v428
        %v430 = vpop.f32.mrf.mxu0
        %431 = vmatprep.mubr.f32.mxu0 0.0
        %432 = vmatmul.mubr.f32.gmra.mxu0 %v263
        %v433 = vpop.f32.mrf.mxu0
        %v434 = vadd.f32 0.0, %v433
        %v435 = vpop.f32.mrf.mxu0
        %436 = vmatprep.mubr.f32.mxu0 0.0
        %437 = vmatmul.mubr.f32.gmra.mxu0 %v264
        %v438 = vpop.f32.mrf.mxu0
        %v439 = vadd.f32 0.0, %v438
        %v440 = vpop.f32.mrf.mxu0
        %441 = vmatprep.mubr.f32.mxu0 0.0
        %442 = vmatmul.mubr.f32.gmra.mxu0 %v265
        %v443 = vpop.f32.mrf.mxu0
        %v444 = vadd.f32 0.0, %v443
        %v445 = vpop.f32.mrf.mxu0
        %446 = vmatprep.mubr.f32.mxu0 0.0
        %447 = vmatmul.mubr.f32.gmra.mxu0 %v266
        %v448 = vpop.f32.mrf.mxu0
        %v449 = vadd.f32 0.0, %v448
        %v450 = vpop.f32.mrf.mxu0
        %451 = vmatprep.mubr.f32.mxu0 0.0
        %452 = vmatmul.mubr.f32.gmra.mxu0 %v267
        %v453 = vpop.f32.mrf.mxu0
        %v454 = vadd.f32 0.0, %v453
        %v455 = vpop.f32.mrf.mxu0
        %456 = vmatprep.mubr.f32.mxu0 0.0
        %457 = vmatmul.mubr.f32.gmra.mxu0 %v268
        %v458 = vpop.f32.mrf.mxu0
        %v459 = vadd.f32 0.0, %v458
        %v460 = vpop.f32.mrf.mxu0
        %461 = vmatprep.mubr.f32.mxu0 0.0
        %462 = vmatmul.mubr.f32.gmra.mxu0 %v269
        %v463 = vpop.f32.mrf.mxu0
        %v464 = vadd.f32 0.0, %v463
        %v465 = vpop.f32.mrf.mxu0
        %466 = vmatprep.mubr.f32.mxu0 0.0
        %467 = vmatmul.mubr.f32.gmra.mxu0 %v270
        %v468 = vpop.f32.mrf.mxu0
        %v469 = vadd.f32 0.0, %v468
        %v470 = vpop.f32.mrf.mxu0
        %471 = vmatprep.mubr.f32.mxu0 0.0
        %472 = vmatmul.mubr.f32.gmra.mxu0 %v271
        %v473 = vpop.f32.mrf.mxu0
        %v474 = vadd.f32 0.0, %v473
        %v475 = vpop.f32.mrf.mxu0
        %476 = vmatprep.mubr.f32.mxu0 0.0
        %477 = vmatmul.mubr.f32.gmra.mxu0 %v272
        %v478 = vpop.f32.mrf.mxu0
        %v479 = vadd.f32 0.0, %v478
        %v480 = vpop.f32.mrf.mxu0
        %481 = vmatprep.mubr.f32.mxu0 0.0
        %482 = vmatmul.mubr.f32.gmra.mxu0 %v273
        %v483 = vpop.f32.mrf.mxu0
        %v484 = vadd.f32 0.0, %v483
        %v485 = vpop.f32.mrf.mxu0
        %486 = vmatprep.mubr.f32.mxu0 0.0
        %487 = vmatmul.mubr.f32.gmra.mxu0 %v274
        %v488 = vpop.f32.mrf.mxu0
        %v489 = vadd.f32 0.0, %v488
        %v490 = vpop.f32.mrf.mxu0
        %491 = vmatprep.mubr.f32.mxu0 0.0
        %492 = vmatmul.mubr.f32.gmra.mxu0 %v275
        %v493 = vpop.f32.mrf.mxu0
        %v494 = vadd.f32 0.0, %v493
        %v495 = vpop.f32.mrf.mxu0
        %496 = vmatprep.mubr.f32.mxu0 0.0
        %497 = vmatmul.mubr.f32.gmra.mxu0 %v276
        %v498 = vpop.f32.mrf.mxu0
        %v499 = vadd.f32 0.0, %v498
        %v500 = vpop.f32.mrf.mxu0
        %501 = vmatprep.mubr.f32.mxu0 0.0
        %502 = vmatmul.mubr.f32.gmra.mxu0 %v277
        %v503 = vpop.f32.mrf.mxu0
        %v504 = vadd.f32 0.0, %v503
        %v505 = vpop.f32.mrf.mxu0
        %506 = vmatprep.mubr.f32.mxu0 0.0
        %507 = vmatmul.mubr.f32.gmra.mxu0 %v278
        %v508 = vpop.f32.mrf.mxu0
        %v509 = vadd.f32 0.0, %v508
        %v510 = vpop.f32.mrf.mxu0
        %511 = vmatprep.mubr.f32.mxu0 0.0
        %512 = vmatmul.mubr.f32.gmra.mxu0 %v279
        %v513 = vpop.f32.mrf.mxu0
        %v514 = vadd.f32 0.0, %v513
        %v515 = vpop.f32.mrf.mxu0
        %516 = vmatprep.mubr.f32.mxu0 0.0
        %517 = vmatmul.mubr.f32.gmra.mxu0 %v280
        %v518 = vpop.f32.mrf.mxu0
        %v519 = vadd.f32 0.0, %v518
        %v520 = vpop.f32.mrf.mxu0
        %521 = vdwg.mxu0
        %522 = vst [vmem:[%s234] sm:$0xff] %v364
        %523 = vst [vmem:[%s234 + $0x8] sm:$0xff] %v369
        %524 = vst [vmem:[%s234 + $0x10] sm:$0xff] %v374
        %525 = vst [vmem:[%s234 + $0x18] sm:$0xff] %v379
        %526 = vst [vmem:[%s234 + $0x20] sm:$0xff] %v384
        %527 = vst [vmem:[%s234 + $0x28] sm:$0xff] %v389
        %528 = vst [vmem:[%s234 + $0x30] sm:$0xff] %v394
        %529 = vst [vmem:[%s234 + $0x38] sm:$0xff] %v399
        %530 = vst [vmem:[%s234 + $0x40] sm:$0xff] %v404
        %531 = vst [vmem:[%s234 + $0x48] sm:$0xff] %v409
        %532 = vst [vmem:[%s234 + $0x50] sm:$0xff] %v414
        %533 = vst [vmem:[%s234 + $0x58] sm:$0xff] %v419
        %534 = vst [vmem:[%s234 + $0x60] sm:$0xff] %v424
        %535 = vst [vmem:[%s234 + $0x68] sm:$0xff] %v429
        %536 = vst [vmem:[%s234 + $0x70] sm:$0xff] %v434
        %537 = vst [vmem:[%s234 + $0x78] sm:$0xff] %v439
        %538 = vst [vmem:[%s234 + $0x80] sm:$0xff] %v444
        %539 = vst [vmem:[%s234 + $0x88] sm:$0xff] %v449
        %540 = vst [vmem:[%s234 + $0x90] sm:$0xff] %v454
        %541 = vst [vmem:[%s234 + $0x98] sm:$0xff] %v459
        %542 = vst [vmem:[%s234 + $0xa0] sm:$0xff] %v464
        %543 = vst [vmem:[%s234 + $0xa8] sm:$0xff] %v469
        %544 = vst [vmem:[%s234 + $0xb0] sm:$0xff] %v474
        %545 = vst [vmem:[%s234 + $0xb8] sm:$0xff] %v479
        %546 = vst [vmem:[%s234 + $0xc0] sm:$0xff] %v484
        %547 = vst [vmem:[%s234 + $0xc8] sm:$0xff] %v489
        %548 = vst [vmem:[%s234 + $0xd0] sm:$0xff] %v494
        %549 = vst [vmem:[%s234 + $0xd8] sm:$0xff] %v499
        %550 = vst [vmem:[%s234 + $0xe0] sm:$0xff] %v504
        %551 = vst [vmem:[%s234 + $0xe8] sm:$0xff] %v509
        %552 = vst [vmem:[%s234 + $0xf0] sm:$0xff] %v514
        %553 = vst [vmem:[%s234 + $0xf8] sm:$0xff] %v519
        %v554 = vadd.f32 %v364, %v369
        %v555 = vadd.f32 %v554, %v374
        %v556 = vadd.f32 %v555, %v379
        %v557 = vadd.f32 %v556, %v384
        %v558 = vadd.f32 %v557, %v389
        %v559 = vadd.f32 %v558, %v394
        %v560 = vadd.f32 %v559, %v399
        %v561 = vadd.f32 %v560, %v404
        %v562 = vadd.f32 %v561, %v409
        %v563 = vadd.f32 %v562, %v414
        %v564 = vadd.f32 %v563, %v419
        %v565 = vadd.f32 %v564, %v424
        %v566 = vadd.f32 %v565, %v429
        %v567 = vadd.f32 %v566, %v434
        %v568 = vadd.f32 %v567, %v439
        %v569 = vadd.f32 %v568, %v444
        %v570 = vadd.f32 %v569, %v449
        %v571 = vadd.f32 %v570, %v454
        %v572 = vadd.f32 %v571, %v459
        %v573 = vadd.f32 %v572, %v464
        %v574 = vadd.f32 %v573, %v469
        %v575 = vadd.f32 %v574, %v474
        %v576 = vadd.f32 %v575, %v479
        %v577 = vadd.f32 %v576, %v484
        %v578 = vadd.f32 %v577, %v489
        %v579 = vadd.f32 %v578, %v494
        %v580 = vadd.f32 %v579, %v499
        %v581 = vadd.f32 %v580, %v504
        %v582 = vadd.f32 %v581, %v509
        %v583 = vadd.f32 %v582, %v514
        %v584 = vadd.f32 %v583, %v519
        %v585 = vrot.slane %v584, 4
        %v586 = vadd.f32 %v584, %v585
        %v587 = vrot.slane %v586, 2
        %v588 = vadd.f32 %v586, %v587
        %v589 = vrot.slane %v588, 1
        %v590 = vadd.f32 %v588, %v589
        %591 = vst [vmem:[%s240] sm:$0x1] %v590
        %v592 = vmul.f32 %v364, %v364
        %v593 = vmul.f32 %v369, %v369
        %v594 = vmul.f32 %v374, %v374
        %v595 = vmul.f32 %v379, %v379
        %v596 = vmul.f32 %v384, %v384
        %v597 = vmul.f32 %v389, %v389
        %v598 = vmul.f32 %v394, %v394
        %v599 = vmul.f32 %v399, %v399
        %v600 = vmul.f32 %v404, %v404
        %v601 = vmul.f32 %v409, %v409
        %v602 = vmul.f32 %v414, %v414
        %v603 = vmul.f32 %v419, %v419
        %v604 = vmul.f32 %v424, %v424
        %v605 = vmul.f32 %v429, %v429
        %v606 = vmul.f32 %v434, %v434
        %v607 = vmul.f32 %v439, %v439
        %v608 = vmul.f32 %v444, %v444
        %v609 = vmul.f32 %v449, %v449
        %v610 = vmul.f32 %v454, %v454
        %v611 = vmul.f32 %v459, %v459
        %v612 = vmul.f32 %v464, %v464
        %v613 = vmul.f32 %v469, %v469
        %v614 = vmul.f32 %v474, %v474
        %v615 = vmul.f32 %v479, %v479
        %v616 = vmul.f32 %v484, %v484
        %v617 = vmul.f32 %v489, %v489
        %v618 = vmul.f32 %v494, %v494
        %v619 = vmul.f32 %v499, %v499
        %v620 = vmul.f32 %v504, %v504
        %v621 = vmul.f32 %v509, %v509
        %v622 = vmul.f32 %v514, %v514
        %v623 = vmul.f32 %v519, %v519
        %v624 = vadd.f32 %v592, %v593
        %v625 = vadd.f32 %v624, %v594
        %v626 = vadd.f32 %v625, %v595
        %v627 = vadd.f32 %v626, %v596
        %v628 = vadd.f32 %v627, %v597
        %v629 = vadd.f32 %v628, %v598
        %v630 = vadd.f32 %v629, %v599
        %v631 = vadd.f32 %v630, %v600
        %v632 = vadd.f32 %v631, %v601
        %v633 = vadd.f32 %v632, %v602
        %v634 = vadd.f32 %v633, %v603
        %v635 = vadd.f32 %v634, %v604
        %v636 = vadd.f32 %v635, %v605
        %v637 = vadd.f32 %v636, %v606
        %v638 = vadd.f32 %v637, %v607
        %v639 = vadd.f32 %v638, %v608
        %v640 = vadd.f32 %v639, %v609
        %v641 = vadd.f32 %v640, %v610
        %v642 = vadd.f32 %v641, %v611
        %v643 = vadd.f32 %v642, %v612
        %v644 = vadd.f32 %v643, %v613
        %v645 = vadd.f32 %v644, %v614
        %v646 = vadd.f32 %v645, %v615
        %v647 = vadd.f32 %v646, %v616
        %v648 = vadd.f32 %v647, %v617
        %v649 = vadd.f32 %v648, %v618
        %v650 = vadd.f32 %v649, %v619
        %v651 = vadd.f32 %v650, %v620
        %v652 = vadd.f32 %v651, %v621
        %v653 = vadd.f32 %v652, %v622
        %v654 = vadd.f32 %v653, %v623
        %v655 = vrot.slane %v654, 4
        %v656 = vadd.f32 %v654, %v655
        %v657 = vrot.slane %v656, 2
        %v658 = vadd.f32 %v656, %v657
        %v659 = vrot.slane %v658, 1
        %v660 = vadd.f32 %v658, %v659
        %661 = vst [vmem:[%s246] sm:$0x1] %v660
        %s662 = sand.u32 %s81, 1
        %s663 = scalar_lea.sflag [#allocation4], %s662
        %s664 = sand.u32 %s81, 1
        %s665 = smul.addr %s664, 256
        %s666 = scalar_lea.vmem [#allocation7], %s665
        %s667 = sand.u32 %s26, 1
        %s668 = scalar_lea.sflag [#allocation9], %s667
        %s669 = sand.u32 %s107, 1
        %s670 = scalar_lea.vmem [#allocation8], %s669
        %s671 = sand.u32 %s26, 1
        %s672 = scalar_lea.sflag [#allocation9], %s671
        %s673 = sand.u32 %s133, 1
        %s674 = scalar_lea.vmem [#allocation10], %s673
        // Predicated region
        $region37: #{tpu_custom_call.1} parent=27 // pred_check
          %p675 = pneg %p91
        $region38: #{tpu_custom_call.1} parent=27 // pred_check_branch
          %677 = sbr.rel (%p675) target = $region40
        $region39: #{tpu_custom_call.1} parent=27 // pred_region
          %s678 = smul.u32 32, %s26
          %s680 = ssub.s32 4096, 4096
          %681 = vsyncadd %s663, %s680
          %s682 = smul.addr %s678, 128
          %s683 = scalar_lea.hbm %s2, %s682
          %s684 = sshll.u32 %s666, 4
          %s685 = int_to_ptr.vmem [resolvable:$true] %s684
          %690 = dma.vmem_to_hbm [thread:$0]  %s685, 4096, %s683, %s663, 128, 128, 8
        $region40: #{tpu_custom_call.1} parent=27 // pred_fallthru
          _
        // Predicated region
        $region41: #{tpu_custom_call.1} parent=27 // pred_check
          %p691 = pneg %p117
        $region42: #{tpu_custom_call.1} parent=27 // pred_check_branch
          %693 = sbr.rel (%p691) target = $region44
        $region43: #{tpu_custom_call.1} parent=27 // pred_region
          %s695 = ssub.s32 16, 16
          %696 = vsyncadd %s668, %s695
          %s697 = smul.addr %s26, 16
          %s698 = scalar_lea.hbm %s3, %s697
          %s700 = sshll.u32 %s670, 4
          %s701 = int_to_ptr.vmem [resolvable:$true] %s700
          %703 = dma.vmem_to_hbm [thread:$0]  %s701, 16, %s698, %s668
        $region44: #{tpu_custom_call.1} parent=27 // pred_fallthru
          _
        // Predicated region
        $region45: #{tpu_custom_call.1} parent=27 // pred_check
          %p704 = pneg %p143
        $region46: #{tpu_custom_call.1} parent=27 // pred_check_branch
          %706 = sbr.rel (%p704) target = $region48
        $region47: #{tpu_custom_call.1} parent=27 // pred_region
          %s708 = ssub.s32 16, 16
          %709 = vsyncadd %s672, %s708
          %s710 = smul.addr %s26, 16
          %s711 = scalar_lea.hbm %s4, %s710
          %s713 = sshll.u32 %s674, 4
          %s714 = int_to_ptr.vmem [resolvable:$true] %s713
          %716 = dma.vmem_to_hbm [thread:$0]  %s714, 16, %s711, %s672
        $region48: #{tpu_custom_call.1} parent=27 // pred_fallthru
          _
      $region28: #{tpu_custom_call.1} parent=5 // pred_fallthru
        _
      %p717 = scmp.le.s32.totalorder 2, %s21
      // Predicated region
      $region49: #{tpu_custom_call.1} parent=5 // pred_check
        %p718 = pneg %p717
      $region50: #{tpu_custom_call.1} parent=5 // pred_check_branch
        %720 = sbr.rel (%p718) target = $region52
      $region51: #{tpu_custom_call.1} parent=5 // pred_region
        %s721 = ssub.s32 %s21, 2
        // Predicated region
        $region53: #{tpu_custom_call.1} parent=51 // pred_check
          %p722 = pneg %p97
        $region54: #{tpu_custom_call.1} parent=51 // pred_check_branch
          %724 = sbr.rel (%p722) target = $region56
        $region55: #{tpu_custom_call.1} parent=51 // pred_region
          %s725 = sand.u32 %s82, 1
          %s726 = scalar_lea.sflag [#allocation4], %s725
          %s727 = sand.u32 %s82, 1
          %s728 = smul.addr %s727, 256
          %s729 = scalar_lea.vmem [#allocation7], %s728
          %730 = dma.done %s726, 4096
        $region56: #{tpu_custom_call.1} parent=51 // pred_fallthru
          _
        // Predicated region
        $region57: #{tpu_custom_call.1} parent=51 // pred_check
          %p731 = pneg %p123
        $region58: #{tpu_custom_call.1} parent=51 // pred_check_branch
          %733 = sbr.rel (%p731) target = $region60
        $region59: #{tpu_custom_call.1} parent=51 // pred_region
          %s734 = sand.u32 %s27, 1
          %s735 = scalar_lea.sflag [#allocation9], %s734
          %s736 = sand.u32 %s108, 1
          %s737 = scalar_lea.vmem [#allocation8], %s736
          %738 = dma.done %s735, 16
        $region60: #{tpu_custom_call.1} parent=51 // pred_fallthru
          _
        // Predicated region
        $region61: #{tpu_custom_call.1} parent=51 // pred_check
          %p739 = pneg %p149
        $region62: #{tpu_custom_call.1} parent=51 // pred_check_branch
          %741 = sbr.rel (%p739) target = $region64
        $region63: #{tpu_custom_call.1} parent=51 // pred_region
          %s742 = sand.u32 %s27, 1
          %s743 = scalar_lea.sflag [#allocation9], %s742
          %s744 = sand.u32 %s134, 1
          %s745 = scalar_lea.vmem [#allocation10], %s744
          %746 = dma.done %s743, 16
        $region64: #{tpu_custom_call.1} parent=51 // pred_fallthru
          _
      $region52: #{tpu_custom_call.1} parent=5 // pred_fallthru
        _
    $region6: #{tpu_custom_call.1} parent=1 // loop_footer
      %s25 = sadd.s32 1, %s21
    $region7: #{tpu_custom_call.1} parent=1 // loop_footer_branch
      %20 = sbr.rel target = $region3
    $region8: #{tpu_custom_call.1} parent=1 // loop_exit
      _
    %747 = vsyncpa [#allocation3], 1
    %s748 = scalar_lea.sflag [#allocation3], 1
    %749 = vsyncpa %s748, 1
    %750 = vsyncpa [#allocation6], 1
    %751 = vsyncpa [#allocation4], 1
    %s752 = scalar_lea.sflag [#allocation4], 1
    %753 = vsyncpa %s752, 1
    %754 = vsyncpa [#allocation9], 1
    %s755 = scalar_lea.sflag [#allocation9], 1
    %756 = vsyncpa %s755, 1

</llo_original>
